<compile_context>
chip_gen: v7x
topology: tpu7x:2x2x1
jax: 0.10.0
libtpu: 0.0.40
codegen_flags: <defaults>
</compile_context>

<pallas_src>
import numpy as np
import jax
import jax.numpy as jnp
from jax.experimental import pallas as pl
from jax.experimental.pallas import tpu as pltpu

# ------------------------- configuration (small shapes) ----------------------
DIM = 32          # `dim` (LayerNorm / mlp input feature size)
TOKEN_DIM = 16    # `token_dim` (C)
IMG_SIZE = 16
RATIO = 2
KH, KW = 3, 3
STRIDE = 2
PAD = 1
B = 2

OH = IMG_SIZE // RATIO                    # 8
OW = IMG_SIZE // RATIO                    # 8
NH = (OH + 2 * PAD - KH) // STRIDE + 1    # 4
NW = (OW + 2 * PAD - KW) // STRIDE + 1    # 4
L = NH * NW                               # 16  fold blocks = input sequence length
Q = OH * OW                               # 64  output sequence length
C = TOKEN_DIM                             # 16
K9 = KH * KW                              # 9
EPS = 1e-5


def _gelu_exact(x):
    # Matches torch's default (erf) GELU.
    return 0.5 * x * (1.0 + jax.lax.erf(x / jnp.sqrt(2.0).astype(x.dtype)))


# --------------------------------- kernel ------------------------------------
def decoder_kernel(x_ref, w1t_ref, b1t_ref, wpt_ref, bpt_ref, gblk_ref, out_ref):
    # x enters token-major: (B*L, DIM).  LayerNorm over features (last axis);
    # gamma/beta are already folded into w1t/b1t host-side.
    x = x_ref[...]                                        # (B*L, DIM) f32
    mean = jnp.mean(x, axis=-1, keepdims=True)            # (B*L, 1)
    xc = x - mean
    var = jnp.mean(xc * xc, axis=-1, keepdims=True)
    xn = xc * jax.lax.rsqrt(var + EPS)                    # (B*L, DIM)

    # Linear(DIM->C) with LN affine folded in.  Contract DIM on BOTH operands so
    # the result lands feature-major (C, B*L) without a wrapper-side transpose.
    h = jax.lax.dot_general(
        w1t_ref[...], xn,                                 # (C, DIM) x (B*L, DIM)
        dimension_numbers=(((1,), (1,)), ((), ())),
        preferred_element_type=jnp.float32,
    ) + b1t_ref[...]                                      # (C, B*L)
    h = _gelu_exact(h)

    # Second mlp Linear fused (host-side) into project: Linear(C -> 9C).
    p = jnp.dot(wpt_ref[...], h,
                preferred_element_type=jnp.float32) + bpt_ref[...]   # (9C, B*L)

    # Fold: 9 accumulating MXU matmuls against per-offset block-diagonal 0/1
    # scatter matrices.  Slices of p are sublane-only (offset k*C, C=16 aligned);
    # result is directly the lane-dense (C, B*Q) = (16, 128) tile.
    acc = jnp.dot(p[0:C, :], gblk_ref[0], preferred_element_type=jnp.float32)
    for k in range(1, K9):                                # static unrolled loop
        acc = acc + jnp.dot(p[k * C:(k + 1) * C, :], gblk_ref[k],
                            preferred_element_type=jnp.float32)
    out_ref[...] = acc.astype(out_ref.dtype)              # (C, B*Q) single unmasked store


# ------------------------------- constants -----------------------------------
def make_fold_blocks():
    """Gblk[k, b*L + l, b*Q + q] = 1 iff fold block l at kernel offset k writes
    output pixel q (block-diagonal over the batch).  f32: 0/1 values, ~147 KB."""
    G = np.zeros((K9, L, Q), np.float32)
    for lh in range(NH):
        for lw in range(NW):
            l = lh * NW + lw
            for kh in range(KH):
                for kw in range(KW):
                    i = lh * STRIDE - PAD + kh
                    j = lw * STRIDE - PAD + kw
                    if 0 <= i < OH and 0 <= j < OW:
                        G[kh * KW + kw, l, i * OW + j] = 1.0
    Gblk = np.zeros((K9, B * L, B * Q), np.float32)
    for b in range(B):
        Gblk[:, b * L:(b + 1) * L, b * Q:(b + 1) * Q] = G
    return jnp.asarray(Gblk, jnp.float32)


def fuse_params(gamma, beta, w1, b1, w2, b2, wp, bp):
    """Host-side fusions (numpy f32):
       - LN affine folded into first Linear:   w1' = diag(gamma) @ w1,  b1' = beta @ w1 + b1
       - second Linear folded into project:    wp' = w2 @ wp,           bp' = b2 @ wp + bp
       - project columns permuted torch order (c*9+k) -> kernel order (k*C+c)
         (MUST stay consistent with Gblk's leading k axis)
       - transposed for the feature-major kernel layout."""
    gamma, beta, w1, b1, w2, b2, wp, bp = map(np.asarray, (gamma, beta, w1, b1, w2, b2, wp, bp))
    w1f = gamma[:, None] * w1                             # (DIM, C)
    b1f = beta @ w1 + b1                                  # (C,)
    wpf = w2 @ wp                                         # (C, 9C)
    bpf = b2 @ wp + bp                                    # (9C,)
    perm = np.array([c * K9 + k for k in range(K9) for c in range(C)])
    wpf = wpf[:, perm]
    bpf = bpf[perm]
    return (jnp.asarray(w1f.T, jnp.float32),                   # (C, DIM)
            jnp.asarray(b1f.reshape(C, 1), jnp.float32),       # (C, 1)
            jnp.asarray(wpf.T, jnp.float32),                   # (9C, C)
            jnp.asarray(bpf.reshape(K9 * C, 1), jnp.float32))  # (9C, 1)


# ------------------------------- wrapper --------------------------------------
_FLOPS = 2 * (C * DIM * B * L + (K9 * C) * C * B * L + K9 * C * B * L * B * Q)
_TRANSCENDENTALS = C * B * L
_BYTES = 4 * (B * L * DIM + C * DIM + C + K9 * C * C + K9 * C
              + K9 * (B * L) * (B * Q) + C * B * Q)


@jax.jit
def decoder_forward(x, w1t, b1t, wpt, bpt, gblk):
    xt = x.reshape(B * L, DIM)                            # free contiguous reshape (no transpose HLO)
    vmem = pl.BlockSpec(memory_space=pltpu.MemorySpace.VMEM)   # whole arrays in VMEM, grid-less
    out_t = pl.pallas_call(
        decoder_kernel,
        out_shape=jax.ShapeDtypeStruct((C, B * Q), jnp.float32),
        in_specs=[vmem] * 6,
        out_specs=vmem,
        cost_estimate=pl.CostEstimate(flops=_FLOPS,
                                      transcendentals=_TRANSCENDENTALS,
                                      bytes_accessed=_BYTES),
    )(xt, w1t, b1t, wpt, bpt, gblk)
    return out_t.T.reshape(B, Q, C)                       # (B, HW, C), matches the torch module


# --------------------------- pure-JAX reference --------------------------------
def reference_forward(x, gamma, beta, w1, b1, w2, b2, wp, bp):
    """Mirrors the PyTorch forward exactly (LayerNorm -> mlp -> project -> Fold)."""
    mean = x.mean(-1, keepdims=True)
    var = ((x - mean) ** 2).mean(-1, keepdims=True)
    xn = (x - mean) / jnp.sqrt(var + EPS) * gamma + beta
    h = _gelu_exact(xn @ w1 + b1)
    h = h @ w2 + b2
    p = h @ wp + bp                                      # (B, L, C*9), torch cols = c*9 + k
    p = jnp.transpose(p, (0, 2, 1))                      # (B, C*9, L) == .transpose(1, 2)
    out_img = jnp.zeros((B, C, OH, OW), jnp.float32)
    chan = np.arange(C) * K9
    for lh in range(NH):
        for lw in range(NW):
            l = lh * NW + lw
            for kh in range(KH):
                for kw in range(KW):
                    i = lh * STRIDE - PAD + kh
                    j = lw * STRIDE - PAD + kw
                    if 0 <= i < OH and 0 <= j < OW:
                        out_img = out_img.at[:, :, i, j].add(p[:, chan + kh * KW + kw, l])
    return out_img.reshape(B, C, Q).transpose(0, 2, 1)   # (B, Q, C)


# ------------------------------------ main -------------------------------------
if __name__ == "__main__":
    key = jax.random.PRNGKey(0)
    ks = jax.random.split(key, 9)

    # Deterministic synthetic parameters (shapes from decoder_module.__init__).
    gamma = 1.0 + 0.1 * jax.random.normal(ks[0], (DIM,), jnp.float32)   # norm.weight
    beta = 0.1 * jax.random.normal(ks[1], (DIM,), jnp.float32)          # norm.bias
    w1 = 0.05 * jax.random.normal(ks[2], (DIM, C), jnp.float32)         # mlp[0]
    b1 = 0.05 * jax.random.normal(ks[3], (C,), jnp.float32)
    w2 = 0.05 * jax.random.normal(ks[4], (C, C), jnp.float32)           # mlp[2]
    b2 = 0.05 * jax.random.normal(ks[5], (C,), jnp.float32)
    wp = 0.05 * jax.random.normal(ks[6], (C, C * K9), jnp.float32)      # project
    bp = 0.05 * jax.random.normal(ks[7], (C * K9,), jnp.float32)
    x = jax.random.normal(ks[8], (B, L, DIM), jnp.float32)              # dec_fea

    w1t, b1t, wpt, bpt = fuse_params(gamma, beta, w1, b1, w2, b2, wp, bp)
    gblk = make_fold_blocks()

    out = decoder_forward(x, w1t, b1t, wpt, bpt, gblk)
    out = jax.block_until_ready(out)

    ref = reference_forward(x, gamma, beta, w1, b1, w2, b2, wp, bp)
    # Slightly looser than 1e-5: host-side weight fusion changes f32 summation order.
    np.testing.assert_allclose(np.asarray(out), np.asarray(ref), rtol=5e-5, atol=5e-5)

    print("KERNEL_OK")
</pallas_src>

<mosaic_0001>
module attributes {stable_mosaic.version = 11 : i64} {
  func.func @decoder_kernel(%arg0: memref<32x32xf32, #tpu.memory_space<vmem>>, %arg1: memref<16x32xf32, #tpu.memory_space<vmem>>, %arg2: memref<16x1xf32, #tpu.memory_space<vmem>>, %arg3: memref<144x16xf32, #tpu.memory_space<vmem>>, %arg4: memref<144x1xf32, #tpu.memory_space<vmem>>, %arg5: memref<9x32x128xf32, #tpu.memory_space<vmem>>, %arg6: memref<16x128xf32, #tpu.memory_space<vmem>>) attributes {dimension_semantics = [], scalar_prefetch = 0 : i64, scratch_operands = 0 : i64, tpu.core_type = #tpu.core_type<tc>} {
    %c0 = arith.constant 0 : index
    %c0_0 = arith.constant 0 : index
    %0 = vector.load %arg0[%c0, %c0_0] : memref<32x32xf32, #tpu.memory_space<vmem>>, vector<32x32xf32>
    %cst = arith.constant dense<0.000000e+00> : vector<32xf32>
    %1 = vector.multi_reduction <add>, %0, %cst [1] : vector<32x32xf32> to vector<32xf32>
    %2 = vector.shape_cast %1 : vector<32xf32> to vector<32x1xf32>
    %cst_1 = arith.constant 3.200000e+01 : f32
    %3 = vector.broadcast %cst_1 : f32 to vector<32x1xf32>
    %4 = arith.divf %2, %3 : vector<32x1xf32>
    %5 = vector.broadcast %4 : vector<32x1xf32> to vector<32x32xf32>
    %6 = arith.subf %0, %5 : vector<32x32xf32>
    %7 = arith.mulf %6, %6 : vector<32x32xf32>
    %cst_2 = arith.constant dense<0.000000e+00> : vector<32xf32>
    %8 = vector.multi_reduction <add>, %7, %cst_2 [1] : vector<32x32xf32> to vector<32xf32>
    %9 = vector.shape_cast %8 : vector<32xf32> to vector<32x1xf32>
    %cst_3 = arith.constant 3.200000e+01 : f32
    %10 = vector.broadcast %cst_3 : f32 to vector<32x1xf32>
    %11 = arith.divf %9, %10 : vector<32x1xf32>
    %cst_4 = arith.constant 9.99999974E-6 : f32
    %12 = vector.broadcast %cst_4 : f32 to vector<32x1xf32>
    %13 = arith.addf %11, %12 : vector<32x1xf32>
    %14 = math.rsqrt %13 : vector<32x1xf32>
    %15 = vector.broadcast %14 : vector<32x1xf32> to vector<32x32xf32>
    %16 = arith.mulf %6, %15 : vector<32x32xf32>
    %c0_5 = arith.constant 0 : index
    %c0_6 = arith.constant 0 : index
    %17 = vector.load %arg1[%c0_5, %c0_6] : memref<16x32xf32, #tpu.memory_space<vmem>>, vector<16x32xf32>
    %cst_7 = arith.constant dense<0.000000e+00> : vector<16x32xf32>
    %18 = tpu.matmul %17, %16, %cst_7 {dimension_numbers = #tpu.dot_dimension_numbers<[1], [1], [0], [0], [0, 0, 1, 0], [], []>} : vector<16x32xf32>, vector<32x32xf32>, vector<16x32xf32> -> vector<16x32xf32>
    %c0_8 = arith.constant 0 : index
    %c0_9 = arith.constant 0 : index
    %19 = vector.load %arg2[%c0_8, %c0_9] : memref<16x1xf32, #tpu.memory_space<vmem>>, vector<16x1xf32>
    %20 = vector.broadcast %19 : vector<16x1xf32> to vector<16x32xf32>
    %21 = arith.addf %18, %20 : vector<16x32xf32>
    %cst_10 = arith.constant 5.000000e-01 : f32
    %22 = vector.broadcast %cst_10 : f32 to vector<16x32xf32>
    %23 = arith.mulf %22, %21 : vector<16x32xf32>
    %cst_11 = arith.constant 2.000000e+00 : f32
    %24 = math.sqrt %cst_11 : f32
    %25 = vector.broadcast %24 : f32 to vector<16x32xf32>
    %26 = arith.divf %21, %25 : vector<16x32xf32>
    %27 = math.erf %26 : vector<16x32xf32>
    %cst_12 = arith.constant 1.000000e+00 : f32
    %28 = vector.broadcast %cst_12 : f32 to vector<16x32xf32>
    %29 = arith.addf %28, %27 : vector<16x32xf32>
    %30 = arith.mulf %23, %29 : vector<16x32xf32>
    %c0_13 = arith.constant 0 : index
    %c0_14 = arith.constant 0 : index
    %31 = vector.load %arg3[%c0_13, %c0_14] : memref<144x16xf32, #tpu.memory_space<vmem>>, vector<144x16xf32>
    %cst_15 = arith.constant dense<0.000000e+00> : vector<144x32xf32>
    %32 = tpu.matmul %31, %30, %cst_15 {dimension_numbers = #tpu.dot_dimension_numbers<[1], [0], [0], [1], [0, 0, 1, 1], [], []>} : vector<144x16xf32>, vector<16x32xf32>, vector<144x32xf32> -> vector<144x32xf32>
    %c0_16 = arith.constant 0 : index
    %c0_17 = arith.constant 0 : index
    %33 = vector.load %arg4[%c0_16, %c0_17] : memref<144x1xf32, #tpu.memory_space<vmem>>, vector<144x1xf32>
    %34 = vector.broadcast %33 : vector<144x1xf32> to vector<144x32xf32>
    %35 = arith.addf %32, %34 : vector<144x32xf32>
    %36 = vector.extract_strided_slice %35 {offsets = [0, 0], sizes = [16, 32], strides = [1, 1]} : vector<144x32xf32> to vector<16x32xf32>
    %c0_18 = arith.constant 0 : index
    %c0_19 = arith.constant 0 : index
    %c0_20 = arith.constant 0 : index
    %37 = vector.load %arg5[%c0_18, %c0_19, %c0_20] : memref<9x32x128xf32, #tpu.memory_space<vmem>>, vector<1x32x128xf32>
    %38 = vector.shape_cast %37 : vector<1x32x128xf32> to vector<32x128xf32>
    %cst_21 = arith.constant dense<0.000000e+00> : vector<16x128xf32>
    %39 = tpu.matmul %36, %38, %cst_21 {dimension_numbers = #tpu.dot_dimension_numbers<[1], [0], [0], [1], [0, 0, 1, 1], [], []>} : vector<16x32xf32>, vector<32x128xf32>, vector<16x128xf32> -> vector<16x128xf32>
    %40 = vector.extract_strided_slice %35 {offsets = [16, 0], sizes = [16, 32], strides = [1, 1]} : vector<144x32xf32> to vector<16x32xf32>
    %c1 = arith.constant 1 : index
    %c0_22 = arith.constant 0 : index
    %c0_23 = arith.constant 0 : index
    %41 = vector.load %arg5[%c1, %c0_22, %c0_23] : memref<9x32x128xf32, #tpu.memory_space<vmem>>, vector<1x32x128xf32>
    %42 = vector.shape_cast %41 : vector<1x32x128xf32> to vector<32x128xf32>
    %cst_24 = arith.constant dense<0.000000e+00> : vector<16x128xf32>
    %43 = tpu.matmul %40, %42, %cst_24 {dimension_numbers = #tpu.dot_dimension_numbers<[1], [0], [0], [1], [0, 0, 1, 1], [], []>} : vector<16x32xf32>, vector<32x128xf32>, vector<16x128xf32> -> vector<16x128xf32>
    %44 = arith.addf %39, %43 : vector<16x128xf32>
    %45 = vector.extract_strided_slice %35 {offsets = [32, 0], sizes = [16, 32], strides = [1, 1]} : vector<144x32xf32> to vector<16x32xf32>
    %c2 = arith.constant 2 : index
    %c0_25 = arith.constant 0 : index
    %c0_26 = arith.constant 0 : index
    %46 = vector.load %arg5[%c2, %c0_25, %c0_26] : memref<9x32x128xf32, #tpu.memory_space<vmem>>, vector<1x32x128xf32>
    %47 = vector.shape_cast %46 : vector<1x32x128xf32> to vector<32x128xf32>
    %cst_27 = arith.constant dense<0.000000e+00> : vector<16x128xf32>
    %48 = tpu.matmul %45, %47, %cst_27 {dimension_numbers = #tpu.dot_dimension_numbers<[1], [0], [0], [1], [0, 0, 1, 1], [], []>} : vector<16x32xf32>, vector<32x128xf32>, vector<16x128xf32> -> vector<16x128xf32>
    %49 = arith.addf %44, %48 : vector<16x128xf32>
    %50 = vector.extract_strided_slice %35 {offsets = [48, 0], sizes = [16, 32], strides = [1, 1]} : vector<144x32xf32> to vector<16x32xf32>
    %c3 = arith.constant 3 : index
    %c0_28 = arith.constant 0 : index
    %c0_29 = arith.constant 0 : index
    %51 = vector.load %arg5[%c3, %c0_28, %c0_29] : memref<9x32x128xf32, #tpu.memory_space<vmem>>, vector<1x32x128xf32>
    %52 = vector.shape_cast %51 : vector<1x32x128xf32> to vector<32x128xf32>
    %cst_30 = arith.constant dense<0.000000e+00> : vector<16x128xf32>
    %53 = tpu.matmul %50, %52, %cst_30 {dimension_numbers = #tpu.dot_dimension_numbers<[1], [0], [0], [1], [0, 0, 1, 1], [], []>} : vector<16x32xf32>, vector<32x128xf32>, vector<16x128xf32> -> vector<16x128xf32>
    %54 = arith.addf %49, %53 : vector<16x128xf32>
    %55 = vector.extract_strided_slice %35 {offsets = [64, 0], sizes = [16, 32], strides = [1, 1]} : vector<144x32xf32> to vector<16x32xf32>
    %c4 = arith.constant 4 : index
    %c0_31 = arith.constant 0 : index
    %c0_32 = arith.constant 0 : index
    %56 = vector.load %arg5[%c4, %c0_31, %c0_32] : memref<9x32x128xf32, #tpu.memory_space<vmem>>, vector<1x32x128xf32>
    %57 = vector.shape_cast %56 : vector<1x32x128xf32> to vector<32x128xf32>
    %cst_33 = arith.constant dense<0.000000e+00> : vector<16x128xf32>
    %58 = tpu.matmul %55, %57, %cst_33 {dimension_numbers = #tpu.dot_dimension_numbers<[1], [0], [0], [1], [0, 0, 1, 1], [], []>} : vector<16x32xf32>, vector<32x128xf32>, vector<16x128xf32> -> vector<16x128xf32>
    %59 = arith.addf %54, %58 : vector<16x128xf32>
    %60 = vector.extract_strided_slice %35 {offsets = [80, 0], sizes = [16, 32], strides = [1, 1]} : vector<144x32xf32> to vector<16x32xf32>
    %c5 = arith.constant 5 : index
    %c0_34 = arith.constant 0 : index
    %c0_35 = arith.constant 0 : index
    %61 = vector.load %arg5[%c5, %c0_34, %c0_35] : memref<9x32x128xf32, #tpu.memory_space<vmem>>, vector<1x32x128xf32>
    %62 = vector.shape_cast %61 : vector<1x32x128xf32> to vector<32x128xf32>
    %cst_36 = arith.constant dense<0.000000e+00> : vector<16x128xf32>
    %63 = tpu.matmul %60, %62, %cst_36 {dimension_numbers = #tpu.dot_dimension_numbers<[1], [0], [0], [1], [0, 0, 1, 1], [], []>} : vector<16x32xf32>, vector<32x128xf32>, vector<16x128xf32> -> vector<16x128xf32>
    %64 = arith.addf %59, %63 : vector<16x128xf32>
    %65 = vector.extract_strided_slice %35 {offsets = [96, 0], sizes = [16, 32], strides = [1, 1]} : vector<144x32xf32> to vector<16x32xf32>
    %c6 = arith.constant 6 : index
    %c0_37 = arith.constant 0 : index
    %c0_38 = arith.constant 0 : index
    %66 = vector.load %arg5[%c6, %c0_37, %c0_38] : memref<9x32x128xf32, #tpu.memory_space<vmem>>, vector<1x32x128xf32>
    %67 = vector.shape_cast %66 : vector<1x32x128xf32> to vector<32x128xf32>
    %cst_39 = arith.constant dense<0.000000e+00> : vector<16x128xf32>
    %68 = tpu.matmul %65, %67, %cst_39 {dimension_numbers = #tpu.dot_dimension_numbers<[1], [0], [0], [1], [0, 0, 1, 1], [], []>} : vector<16x32xf32>, vector<32x128xf32>, vector<16x128xf32> -> vector<16x128xf32>
    %69 = arith.addf %64, %68 : vector<16x128xf32>
    %70 = vector.extract_strided_slice %35 {offsets = [112, 0], sizes = [16, 32], strides = [1, 1]} : vector<144x32xf32> to vector<16x32xf32>
    %c7 = arith.constant 7 : index
    %c0_40 = arith.constant 0 : index
    %c0_41 = arith.constant 0 : index
    %71 = vector.load %arg5[%c7, %c0_40, %c0_41] : memref<9x32x128xf32, #tpu.memory_space<vmem>>, vector<1x32x128xf32>
    %72 = vector.shape_cast %71 : vector<1x32x128xf32> to vector<32x128xf32>
    %cst_42 = arith.constant dense<0.000000e+00> : vector<16x128xf32>
    %73 = tpu.matmul %70, %72, %cst_42 {dimension_numbers = #tpu.dot_dimension_numbers<[1], [0], [0], [1], [0, 0, 1, 1], [], []>} : vector<16x32xf32>, vector<32x128xf32>, vector<16x128xf32> -> vector<16x128xf32>
    %74 = arith.addf %69, %73 : vector<16x128xf32>
    %75 = vector.extract_strided_slice %35 {offsets = [128, 0], sizes = [16, 32], strides = [1, 1]} : vector<144x32xf32> to vector<16x32xf32>
    %c8 = arith.constant 8 : index
    %c0_43 = arith.constant 0 : index
    %c0_44 = arith.constant 0 : index
    %76 = vector.load %arg5[%c8, %c0_43, %c0_44] : memref<9x32x128xf32, #tpu.memory_space<vmem>>, vector<1x32x128xf32>
    %77 = vector.shape_cast %76 : vector<1x32x128xf32> to vector<32x128xf32>
    %cst_45 = arith.constant dense<0.000000e+00> : vector<16x128xf32>
    %78 = tpu.matmul %75, %77, %cst_45 {dimension_numbers = #tpu.dot_dimension_numbers<[1], [0], [0], [1], [0, 0, 1, 1], [], []>} : vector<16x32xf32>, vector<32x128xf32>, vector<16x128xf32> -> vector<16x128xf32>
    %79 = arith.addf %74, %78 : vector<16x128xf32>
    %c0_46 = arith.constant 0 : index
    %c0_47 = arith.constant 0 : index
    %80 = vector.load %arg6[%c0_46, %c0_47] : memref<16x128xf32, #tpu.memory_space<vmem>>, vector<16x128xf32>
    tpu.vector_store %arg6[%c0_46, %c0_47], %79 {strides = array<i32>} : memref<16x128xf32, #tpu.memory_space<vmem>>, vector<16x128xf32>,
    return
  }
}

</mosaic_0001>

<llo_original>
// kernel: decoder_forward.1
$region0: #{decoder_forward.1}
  #allocation0 [shape = 'u32[]', space=smem, size = 0x4, offset = 0x4, fixed_abs, tag = 'smem constant byte address 0x4 - core index']
  #allocation1 [shape = 'u32[144,128]{1,0:T(1,128)}', space=vmem, size = 0x12000, scoped, tag = 'internal scratch']
  %s0 = inlined_call_operand.vmem [shape: f32[32,32], index: 0, kind: input, shape index: {}]
  %s1 = inlined_call_operand.vmem [shape: f32[16,32], index: 1, kind: input, shape index: {}]
  %s2 = inlined_call_operand.vmem [shape: f32[16,1], index: 2, kind: input, shape index: {}]
  %s3 = inlined_call_operand.vmem [shape: f32[144,16], index: 3, kind: input, shape index: {}]
  %s4 = inlined_call_operand.vmem [shape: f32[144,1], index: 4, kind: input, shape index: {}]
  %s5 = inlined_call_operand.vmem [shape: f32[9,32,128], index: 5, kind: input, shape index: {}]
  %s6 = inlined_call_operand.vmem [shape: f32[16,128], index: 6, kind: output, shape index: {}]
  %s7 = sld [smem:[#allocation0]]
  $region34: #{decoder_forward.1} parent=0
    _
  %s9 = ssub.s32 1, %s7
  %s10 = scalar_select 0, %s9, %s7
  // Predicated region
  $region2: #{decoder_forward.1} parent=0 // pred_check
    _
  $region3: #{decoder_forward.1} parent=0 // pred_check_branch
    %12 = sbr.rel (0) target = $region5
  $region4: #{decoder_forward.1} parent=0 // pred_region
    _
  $region5: #{decoder_forward.1} parent=0 // pred_fallthru
    _
  // Predicated region
  $region6: #{decoder_forward.1} parent=0 // pred_check
    _
  $region7: #{decoder_forward.1} parent=0 // pred_check_branch
    %14 = sbr.rel (0) target = $region9
  $region8: #{decoder_forward.1} parent=0 // pred_region
    _
  $region9: #{decoder_forward.1} parent=0 // pred_fallthru
    _
  // Predicated region
  $region10: #{decoder_forward.1} parent=0 // pred_check
    _
  $region11: #{decoder_forward.1} parent=0 // pred_check_branch
    %16 = sbr.rel (0) target = $region13
  $region12: #{decoder_forward.1} parent=0 // pred_region
    _
  $region13: #{decoder_forward.1} parent=0 // pred_fallthru
    _
  // Predicated region
  $region14: #{decoder_forward.1} parent=0 // pred_check
    _
  $region15: #{decoder_forward.1} parent=0 // pred_check_branch
    %18 = sbr.rel (0) target = $region17
  $region16: #{decoder_forward.1} parent=0 // pred_region
    _
  $region17: #{decoder_forward.1} parent=0 // pred_fallthru
    _
  // Predicated region
  $region18: #{decoder_forward.1} parent=0 // pred_check
    _
  $region19: #{decoder_forward.1} parent=0 // pred_check_branch
    %20 = sbr.rel (0) target = $region21
  $region20: #{decoder_forward.1} parent=0 // pred_region
    _
  $region21: #{decoder_forward.1} parent=0 // pred_fallthru
    _
  // Predicated region
  $region22: #{decoder_forward.1} parent=0 // pred_check
    _
  $region23: #{decoder_forward.1} parent=0 // pred_check_branch
    %22 = sbr.rel (0) target = $region25
  $region24: #{decoder_forward.1} parent=0 // pred_region
    _
  $region25: #{decoder_forward.1} parent=0 // pred_fallthru
    _
  %v23 = vld [vmem:[%s0] sm:$0xff]
  %v24 = vld [vmem:[%s0 + $0x8] sm:$0xff]
  %v25 = vld [vmem:[%s0 + $0x10] sm:$0xff]
  %v26 = vld [vmem:[%s0 + $0x18] sm:$0xff]
  %vm27 = vcmask 261120
  %v28 = vsel %vm27, %v23, 0.0
  %29 = vadd.xlane.f32.xlu0 %v28
  %v30 = vpop.xlane.xlu0 %29
  %v31 = vsel %vm27, %v24, 0.0
  %32 = vadd.xlane.f32.xlu0 %v31
  %v33 = vpop.xlane.xlu0 %32
  %v34 = vsel %vm27, %v25, 0.0
  %35 = vadd.xlane.f32.xlu0 %v34
  %v36 = vpop.xlane.xlu0 %35
  %v37 = vsel %vm27, %v26, 0.0
  %38 = vadd.xlane.f32.xlu0 %v37
  %v39 = vpop.xlane.xlu0 %38
  %v40 = vrcp.pop 32.0
  %v41 = vmul.f32 %v30, %v40
  %v42 = vmul.f32 %v33, %v40
  %v43 = vmul.f32 %v36, %v40
  %v44 = vmul.f32 %v39, %v40
  %v45 = vsub.f32 %v23, %v41
  %v46 = vsub.f32 %v24, %v42
  %v47 = vsub.f32 %v25, %v43
  %v48 = vsub.f32 %v26, %v44
  %v49 = vmul.f32 %v45, %v45
  %v50 = vmul.f32 %v46, %v46
  %v51 = vmul.f32 %v47, %v47
  %v52 = vmul.f32 %v48, %v48
  %v53 = vsel %vm27, %v49, 0.0
  %54 = vadd.xlane.f32.xlu0 %v53
  %v55 = vpop.xlane.xlu0 %54
  %v56 = vsel %vm27, %v50, 0.0
  %57 = vadd.xlane.f32.xlu0 %v56
  %v58 = vpop.xlane.xlu0 %57
  %v59 = vsel %vm27, %v51, 0.0
  %60 = vadd.xlane.f32.xlu0 %v59
  %v61 = vpop.xlane.xlu0 %60
  %v62 = vsel %vm27, %v52, 0.0
  %63 = vadd.xlane.f32.xlu0 %v62
  %v64 = vpop.xlane.xlu0 %63
  %v65 = vmul.f32 %v55, %v40
  %v66 = vmul.f32 %v58, %v40
  %v67 = vmul.f32 %v61, %v40
  %v68 = vmul.f32 %v64, %v40
  %v69 = vadd.f32 %v65, 1e-05
  %v70 = vadd.f32 %v66, 1e-05
  %v71 = vadd.f32 %v67, 1e-05
  %v72 = vadd.f32 %v68, 1e-05
  %v73 = vrsqrt.pop %v69
  %v74 = vrsqrt.pop %v70
  %v75 = vrsqrt.pop %v71
  %v76 = vrsqrt.pop %v72
  %v77 = vmul.f32 %v45, %v73
  %v78 = vmul.f32 %v46, %v74
  %v79 = vmul.f32 %v47, %v75
  %v80 = vmul.f32 %v48, %v76
  %v81 = vld [vmem:[%s1] sm:$0xff]
  %v82 = vld [vmem:[%s1 + $0x8] sm:$0xff]
  %v83 = vld [vmem:[%s2] sm:$0xff]
  %v84 = vld [vmem:[%s2 + $0x8] sm:$0xff]
  %86 = vset.pattern.permute.xlu0 0
  %87 = vperm.xlu0 %86, %v83
  %v88 = vpop.permute.xlu0 %87
  %91 = vset.pattern.permute.xlu0 0
  %92 = vperm.xlu0 %91, %v84
  %v93 = vpop.permute.xlu0 %92
  %v96 = vsel %vm27, %v81, 0
  %v99 = vsel %vm27, %v82, 0
  %v102 = vsel %vm27, %v77, 0
  %v105 = vsel %vm27, %v78, 0
  %v108 = vsel %vm27, %v79, 0
  %v111 = vsel %vm27, %v80, 0
  %113 = vmatprep.subr.mxu0 0.0
  %114 = vmatpush1.xpose.msra.mxu0 %v102
  %115 = vmatprep.subr.mxu0 0.0
  %116 = vmatpush1.xpose.msra.mxu0 %v105
  %117 = vmatprep.subr.mxu0 0.0
  %118 = vmatpush1.xpose.msra.mxu0 %v108
  %119 = vmatprep.subr.mxu0 0.0
  %120 = vmatpush1.xpose.msra.mxu0 %v111
  %121 = vmatprep.subr.mxu0 0.0
  %122 = vmatpush1.xpose.msra.mxu0 0.0
  %123 = vmatprep.subr.mxu0 0.0
  %124 = vmatpush1.xpose.msra.mxu0 0.0
  %125 = vmatprep.subr.mxu0 0.0
  %126 = vmatpush1.xpose.msra.mxu0 0.0
  %127 = vmatprep.subr.mxu0 0.0
  %128 = vmatpush1.xpose.msra.mxu0 0.0
  %129 = vmatprep.subr.mxu0 0.0
  %130 = vmatpush1.xpose.msra.mxu0 0.0
  %131 = vmatprep.subr.mxu0 0.0
  %132 = vmatpush1.xpose.msra.mxu0 0.0
  %133 = vmatprep.subr.mxu0 0.0
  %134 = vmatpush1.xpose.msra.mxu0 0.0
  %135 = vmatprep.subr.mxu0 0.0
  %136 = vmatpush1.xpose.msra.mxu0 0.0
  %137 = vmatprep.subr.mxu0 0.0
  %138 = vmatpush1.xpose.msra.mxu0 0.0
  %139 = vmatprep.subr.mxu0 0.0
  %140 = vmatpush1.xpose.msra.mxu0 0.0
  %141 = vmatprep.subr.mxu0 0.0
  %142 = vmatpush1.xpose.msra.mxu0 0.0
  %143 = vmatprep.subr.mxu0 0.0
  %144 = vmatpush1.xpose.msra.mxu0 0.0
  %145 = vmatprep.subr.mxu0 0.0
  %146 = vmatpush1.xpose.msra.mxu0 0.0
  %147 = vmatprep.subr.mxu0 0.0
  %148 = vmatpush1.xpose.msra.mxu0 0.0
  %149 = vmatprep.subr.mxu0 0.0
  %150 = vmatpush1.xpose.msra.mxu0 0.0
  %151 = vmatprep.subr.mxu0 0.0
  %152 = vmatpush1.xpose.msra.mxu0 0.0
  %153 = vmatprep.subr.mxu0 0.0
  %154 = vmatpush1.xpose.msra.mxu0 0.0
  %155 = vmatprep.subr.mxu0 0.0
  %156 = vmatpush1.xpose.msra.mxu0 0.0
  %157 = vmatprep.subr.mxu0 0.0
  %158 = vmatpush1.xpose.msra.mxu0 0.0
  %159 = vmatprep.subr.mxu0 0.0
  %160 = vmatpush1.xpose.msra.mxu0 0.0
  %161 = vmatprep.subr.mxu0 0.0
  %162 = vmatpush1.xpose.msra.mxu0 0.0
  %163 = vmatprep.subr.mxu0 0.0
  %164 = vmatpush1.xpose.msra.mxu0 0.0
  %165 = vmatprep.subr.mxu0 0.0
  %166 = vmatpush1.xpose.msra.mxu0 0.0
  %167 = vmatprep.subr.mxu0 0.0
  %168 = vmatpush1.xpose.msra.mxu0 0.0
  %169 = vmatprep.subr.mxu0 0.0
  %170 = vmatpush1.xpose.msra.mxu0 0.0
  %171 = vmatprep.subr.mxu0 0.0
  %172 = vmatpush1.xpose.msra.mxu0 0.0
  %173 = vmatprep.subr.mxu0 0.0
  %174 = vmatpush1.xpose.msra.mxu0 0.0
  %175 = vmatprep.subr.mxu0 0.0
  %176 = vmatpush1.xpose.msra.mxu0 0.0
  %177 = vmatprep.mubr.f32.mxu0 0.0
  %178 = vmatmul.mubr.f32.gmra.mrb[0].mxu0 %v96
  %v179 = vpop.f32.mrb[0].mxu0
  %v180 = vadd.f32 %v88, %v179
  %v181 = vpop.f32.mrb[0].mxu0
  %182 = vmatprep.mubr.f32.mxu0 0.0
  %183 = vmatmul.mubr.f32.gmra.mrb[0].mxu0 %v99
  %v184 = vpop.f32.mrb[0].mxu0
  %v185 = vadd.f32 %v93, %v184
  %v186 = vpop.f32.mrb[0].mxu0
  %187 = vdwg.mxu0
  %v188 = vmul.f32 %v180, 0.5
  %v189 = vmul.f32 %v185, 0.5
  %v190 = vrcp.pop 1.4142135
  %v191 = vmul.f32 %v180, %v190
  %v192 = vmul.f32 %v185, %v190
  %v193 = verf.f32.pop %v191
  %v194 = verf.f32.pop %v192
  %v195 = vadd.f32 %v193, 1.0
  %v196 = vadd.f32 %v194, 1.0
  %v197 = vmul.f32 %v188, %v195
  %v198 = vmul.f32 %v189, %v196
  %v199 = vld [vmem:[%s3] sm:$0xff]
  %v200 = vld [vmem:[%s3 + $0x8] sm:$0xff]
  %v201 = vld [vmem:[%s3 + $0x10] sm:$0xff]
  %v202 = vld [vmem:[%s3 + $0x18] sm:$0xff]
  %v203 = vld [vmem:[%s3 + $0x20] sm:$0xff]
  %v204 = vld [vmem:[%s3 + $0x28] sm:$0xff]
  %v205 = vld [vmem:[%s3 + $0x30] sm:$0xff]
  %v206 = vld [vmem:[%s3 + $0x38] sm:$0xff]
  %v207 = vld [vmem:[%s3 + $0x40] sm:$0xff]
  %v208 = vld [vmem:[%s3 + $0x48] sm:$0xff]
  %v209 = vld [vmem:[%s3 + $0x50] sm:$0xff]
  %v210 = vld [vmem:[%s3 + $0x58] sm:$0xff]
  %v211 = vld [vmem:[%s3 + $0x60] sm:$0xff]
  %v212 = vld [vmem:[%s3 + $0x68] sm:$0xff]
  %v213 = vld [vmem:[%s3 + $0x70] sm:$0xff]
  %v214 = vld [vmem:[%s3 + $0x78] sm:$0xff]
  %v215 = vld [vmem:[%s3 + $0x80] sm:$0xff]
  %v216 = vld [vmem:[%s3 + $0x88] sm:$0xff]
  %v217 = vld [vmem:[%s4] sm:$0xff]
  %v218 = vld [vmem:[%s4 + $0x8] sm:$0xff]
  %v219 = vld [vmem:[%s4 + $0x10] sm:$0xff]
  %v220 = vld [vmem:[%s4 + $0x18] sm:$0xff]
  %v221 = vld [vmem:[%s4 + $0x20] sm:$0xff]
  %v222 = vld [vmem:[%s4 + $0x28] sm:$0xff]
  %v223 = vld [vmem:[%s4 + $0x30] sm:$0xff]
  %v224 = vld [vmem:[%s4 + $0x38] sm:$0xff]
  %v225 = vld [vmem:[%s4 + $0x40] sm:$0xff]
  %v226 = vld [vmem:[%s4 + $0x48] sm:$0xff]
  %v227 = vld [vmem:[%s4 + $0x50] sm:$0xff]
  %v228 = vld [vmem:[%s4 + $0x58] sm:$0xff]
  %v229 = vld [vmem:[%s4 + $0x60] sm:$0xff]
  %v230 = vld [vmem:[%s4 + $0x68] sm:$0xff]
  %v231 = vld [vmem:[%s4 + $0x70] sm:$0xff]
  %v232 = vld [vmem:[%s4 + $0x78] sm:$0xff]
  %v233 = vld [vmem:[%s4 + $0x80] sm:$0xff]
  %v234 = vld [vmem:[%s4 + $0x88] sm:$0xff]
  %236 = vset.pattern.permute.xlu0 0
  %237 = vperm.xlu0 %236, %v217
  %v238 = vpop.permute.xlu0 %237
  %241 = vset.pattern.permute.xlu0 0
  %242 = vperm.xlu0 %241, %v218
  %v243 = vpop.permute.xlu0 %242
  %246 = vset.pattern.permute.xlu0 0
  %247 = vperm.xlu0 %246, %v219
  %v248 = vpop.permute.xlu0 %247
  %251 = vset.pattern.permute.xlu0 0
  %252 = vperm.xlu0 %251, %v220
  %v253 = vpop.permute.xlu0 %252
  %256 = vset.pattern.permute.xlu0 0
  %257 = vperm.xlu0 %256, %v221
  %v258 = vpop.permute.xlu0 %257
  %261 = vset.pattern.permute.xlu0 0
  %262 = vperm.xlu0 %261, %v222
  %v263 = vpop.permute.xlu0 %262
  %266 = vset.pattern.permute.xlu0 0
  %267 = vperm.xlu0 %266, %v223
  %v268 = vpop.permute.xlu0 %267
  %271 = vset.pattern.permute.xlu0 0
  %272 = vperm.xlu0 %271, %v224
  %v273 = vpop.permute.xlu0 %272
  %276 = vset.pattern.permute.xlu0 0
  %277 = vperm.xlu0 %276, %v225
  %v278 = vpop.permute.xlu0 %277
  %281 = vset.pattern.permute.xlu0 0
  %282 = vperm.xlu0 %281, %v226
  %v283 = vpop.permute.xlu0 %282
  %286 = vset.pattern.permute.xlu0 0
  %287 = vperm.xlu0 %286, %v227
  %v288 = vpop.permute.xlu0 %287
  %291 = vset.pattern.permute.xlu0 0
  %292 = vperm.xlu0 %291, %v228
  %v293 = vpop.permute.xlu0 %292
  %296 = vset.pattern.permute.xlu0 0
  %297 = vperm.xlu0 %296, %v229
  %v298 = vpop.permute.xlu0 %297
  %301 = vset.pattern.permute.xlu0 0
  %302 = vperm.xlu0 %301, %v230
  %v303 = vpop.permute.xlu0 %302
  %306 = vset.pattern.permute.xlu0 0
  %307 = vperm.xlu0 %306, %v231
  %v308 = vpop.permute.xlu0 %307
  %311 = vset.pattern.permute.xlu0 0
  %312 = vperm.xlu0 %311, %v232
  %v313 = vpop.permute.xlu0 %312
  %316 = vset.pattern.permute.xlu0 0
  %317 = vperm.xlu0 %316, %v233
  %v318 = vpop.permute.xlu0 %317
  %321 = vset.pattern.permute.xlu0 0
  %322 = vperm.xlu0 %321, %v234
  %v323 = vpop.permute.xlu0 %322
  %vm325 = vcmask 130048
  %v327 = vsel %vm325, %v199, 0
  %v330 = vsel %vm325, %v200, 0
  %v333 = vsel %vm325, %v201, 0
  %v336 = vsel %vm325, %v202, 0
  %v339 = vsel %vm325, %v203, 0
  %v342 = vsel %vm325, %v204, 0
  %v345 = vsel %vm325, %v205, 0
  %v348 = vsel %vm325, %v206, 0
  %v351 = vsel %vm325, %v207, 0
  %v354 = vsel %vm325, %v208, 0
  %v357 = vsel %vm325, %v209, 0
  %v360 = vsel %vm325, %v210, 0
  %v363 = vsel %vm325, %v211, 0
  %v366 = vsel %vm325, %v212, 0
  %v369 = vsel %vm325, %v213, 0
  %v372 = vsel %vm325, %v214, 0
  %v375 = vsel %vm325, %v215, 0
  %v378 = vsel %vm325, %v216, 0
  %380 = vmatprep.subr.mxu0 0.0
  %381 = vmatpush1.msra.mxu0 %v197
  %382 = vmatprep.subr.mxu0 0.0
  %383 = vmatpush1.msra.mxu0 %v198
  %384 = vmatprep.subr.mxu0 0.0
  %385 = vmatpush1.msra.mxu0 0.0
  %386 = vmatprep.subr.mxu0 0.0
  %387 = vmatpush1.msra.mxu0 0.0
  %388 = vmatprep.subr.mxu0 0.0
  %389 = vmatpush1.msra.mxu0 0.0
  %390 = vmatprep.subr.mxu0 0.0
  %391 = vmatpush1.msra.mxu0 0.0
  %392 = vmatprep.subr.mxu0 0.0
  %393 = vmatpush1.msra.mxu0 0.0
  %394 = vmatprep.subr.mxu0 0.0
  %395 = vmatpush1.msra.mxu0 0.0
  %396 = vmatprep.subr.mxu0 0.0
  %397 = vmatpush1.msra.mxu0 0.0
  %398 = vmatprep.subr.mxu0 0.0
  %399 = vmatpush1.msra.mxu0 0.0
  %400 = vmatprep.subr.mxu0 0.0
  %401 = vmatpush1.msra.mxu0 0.0
  %402 = vmatprep.subr.mxu0 0.0
  %403 = vmatpush1.msra.mxu0 0.0
  %404 = vmatprep.subr.mxu0 0.0
  %405 = vmatpush1.msra.mxu0 0.0
  %406 = vmatprep.subr.mxu0 0.0
  %407 = vmatpush1.msra.mxu0 0.0
  %408 = vmatprep.subr.mxu0 0.0
  %409 = vmatpush1.msra.mxu0 0.0
  %410 = vmatprep.subr.mxu0 0.0
  %411 = vmatpush1.msra.mxu0 0.0
  %412 = vmatprep.subr.mxu0 0.0
  %413 = vmatpush1.msra.mxu0 0.0
  %414 = vmatprep.subr.mxu0 0.0
  %415 = vmatpush1.msra.mxu0 0.0
  %416 = vmatprep.subr.mxu0 0.0
  %417 = vmatpush1.msra.mxu0 0.0
  %418 = vmatprep.subr.mxu0 0.0
  %419 = vmatpush1.msra.mxu0 0.0
  %420 = vmatprep.subr.mxu0 0.0
  %421 = vmatpush1.msra.mxu0 0.0
  %422 = vmatprep.subr.mxu0 0.0
  %423 = vmatpush1.msra.mxu0 0.0
  %424 = vmatprep.subr.mxu0 0.0
  %425 = vmatpush1.msra.mxu0 0.0
  %426 = vmatprep.subr.mxu0 0.0
  %427 = vmatpush1.msra.mxu0 0.0
  %428 = vmatprep.subr.mxu0 0.0
  %429 = vmatpush1.msra.mxu0 0.0
  %430 = vmatprep.subr.mxu0 0.0
  %431 = vmatpush1.msra.mxu0 0.0
  %432 = vmatprep.subr.mxu0 0.0
  %433 = vmatpush1.msra.mxu0 0.0
  %434 = vmatprep.subr.mxu0 0.0
  %435 = vmatpush1.msra.mxu0 0.0
  %436 = vmatprep.subr.mxu0 0.0
  %437 = vmatpush1.msra.mxu0 0.0
  %438 = vmatprep.subr.mxu0 0.0
  %439 = vmatpush1.msra.mxu0 0.0
  %440 = vmatprep.subr.mxu0 0.0
  %441 = vmatpush1.msra.mxu0 0.0
  %442 = vmatprep.subr.mxu0 0.0
  %443 = vmatpush1.msra.mxu0 0.0
  %444 = vmatprep.mubr.f32.mxu0 0.0
  %445 = vmatmul.mubr.f32.gmra.mrb[0].mxu0 %v327
  %v446 = vpop.f32.mrb[0].mxu0
  %v447 = vadd.f32 %v238, %v446
  %v448 = vpop.f32.mrb[0].mxu0
  %449 = vmatprep.mubr.f32.mxu0 0.0
  %450 = vmatmul.mubr.f32.gmra.mrb[0].mxu0 %v330
  %v451 = vpop.f32.mrb[0].mxu0
  %v452 = vadd.f32 %v243, %v451
  %v453 = vpop.f32.mrb[0].mxu0
  %454 = vmatprep.mubr.f32.mxu0 0.0
  %455 = vmatmul.mubr.f32.gmra.mrb[0].mxu0 %v333
  %v456 = vpop.f32.mrb[0].mxu0
  %v457 = vadd.f32 %v248, %v456
  %v458 = vpop.f32.mrb[0].mxu0
  %459 = vmatprep.mubr.f32.mxu0 0.0
  %460 = vmatmul.mubr.f32.gmra.mrb[0].mxu0 %v336
  %v461 = vpop.f32.mrb[0].mxu0
  %v462 = vadd.f32 %v253, %v461
  %v463 = vpop.f32.mrb[0].mxu0
  %464 = vmatprep.mubr.f32.mxu0 0.0
  %465 = vmatmul.mubr.f32.gmra.mrb[0].mxu0 %v339
  %v466 = vpop.f32.mrb[0].mxu0
  %v467 = vadd.f32 %v258, %v466
  %v468 = vpop.f32.mrb[0].mxu0
  %469 = vmatprep.mubr.f32.mxu0 0.0
  %470 = vmatmul.mubr.f32.gmra.mrb[0].mxu0 %v342
  %v471 = vpop.f32.mrb[0].mxu0
  %v472 = vadd.f32 %v263, %v471
  %v473 = vpop.f32.mrb[0].mxu0
  %474 = vmatprep.mubr.f32.mxu0 0.0
  %475 = vmatmul.mubr.f32.gmra.mrb[0].mxu0 %v345
  %v476 = vpop.f32.mrb[0].mxu0
  %v477 = vadd.f32 %v268, %v476
  %v478 = vpop.f32.mrb[0].mxu0
  %479 = vmatprep.mubr.f32.mxu0 0.0
  %480 = vmatmul.mubr.f32.gmra.mrb[0].mxu0 %v348
  %v481 = vpop.f32.mrb[0].mxu0
  %v482 = vadd.f32 %v273, %v481
  %v483 = vpop.f32.mrb[0].mxu0
  %484 = vmatprep.mubr.f32.mxu0 0.0
  %485 = vmatmul.mubr.f32.gmra.mrb[0].mxu0 %v351
  %v486 = vpop.f32.mrb[0].mxu0
  %v487 = vadd.f32 %v278, %v486
  %v488 = vpop.f32.mrb[0].mxu0
  %489 = vmatprep.mubr.f32.mxu0 0.0
  %490 = vmatmul.mubr.f32.gmra.mrb[0].mxu0 %v354
  %v491 = vpop.f32.mrb[0].mxu0
  %v492 = vadd.f32 %v283, %v491
  %v493 = vpop.f32.mrb[0].mxu0
  %494 = vmatprep.mubr.f32.mxu0 0.0
  %495 = vmatmul.mubr.f32.gmra.mrb[0].mxu0 %v357
  %v496 = vpop.f32.mrb[0].mxu0
  %v497 = vadd.f32 %v288, %v496
  %v498 = vpop.f32.mrb[0].mxu0
  %499 = vmatprep.mubr.f32.mxu0 0.0
  %500 = vmatmul.mubr.f32.gmra.mrb[0].mxu0 %v360
  %v501 = vpop.f32.mrb[0].mxu0
  %v502 = vadd.f32 %v293, %v501
  %v503 = vpop.f32.mrb[0].mxu0
  %504 = vmatprep.mubr.f32.mxu0 0.0
  %505 = vmatmul.mubr.f32.gmra.mrb[0].mxu0 %v363
  %v506 = vpop.f32.mrb[0].mxu0
  %v507 = vadd.f32 %v298, %v506
  %v508 = vpop.f32.mrb[0].mxu0
  %509 = vmatprep.mubr.f32.mxu0 0.0
  %510 = vmatmul.mubr.f32.gmra.mrb[0].mxu0 %v366
  %v511 = vpop.f32.mrb[0].mxu0
  %v512 = vadd.f32 %v303, %v511
  %v513 = vpop.f32.mrb[0].mxu0
  %514 = vmatprep.mubr.f32.mxu0 0.0
  %515 = vmatmul.mubr.f32.gmra.mrb[0].mxu0 %v369
  %v516 = vpop.f32.mrb[0].mxu0
  %v517 = vadd.f32 %v308, %v516
  %v518 = vpop.f32.mrb[0].mxu0
  %519 = vmatprep.mubr.f32.mxu0 0.0
  %520 = vmatmul.mubr.f32.gmra.mrb[0].mxu0 %v372
  %v521 = vpop.f32.mrb[0].mxu0
  %v522 = vadd.f32 %v313, %v521
  %v523 = vpop.f32.mrb[0].mxu0
  %524 = vmatprep.mubr.f32.mxu0 0.0
  %525 = vmatmul.mubr.f32.gmra.mrb[0].mxu0 %v375
  %v526 = vpop.f32.mrb[0].mxu0
  %v527 = vadd.f32 %v318, %v526
  %v528 = vpop.f32.mrb[0].mxu0
  %529 = vmatprep.mubr.f32.mxu0 0.0
  %530 = vmatmul.mubr.f32.gmra.mrb[0].mxu0 %v378
  %v531 = vpop.f32.mrb[0].mxu0
  %v532 = vadd.f32 %v323, %v531
  %v533 = vpop.f32.mrb[0].mxu0
  %534 = vdwg.mxu0
  %v535 = vld [vmem:[%s5] sm:$0xff]
  %v536 = vld [vmem:[%s5 + $0x8] sm:$0xff]
  %v537 = vld [vmem:[%s5 + $0x10] sm:$0xff]
  %v538 = vld [vmem:[%s5 + $0x18] sm:$0xff]
  %s539 = scalar_lea.vmem %s5, 32
  %v540 = vld [vmem:[%s539] sm:$0xff]
  %v541 = vld [vmem:[%s539 + $0x8] sm:$0xff]
  %v542 = vld [vmem:[%s539 + $0x10] sm:$0xff]
  %v543 = vld [vmem:[%s539 + $0x18] sm:$0xff]
  %v545 = vsel %vm27, %v457, 0
  %v548 = vsel %vm27, %v462, 0
  %550 = vmatprep.subr.mxu0 0.0
  %551 = vmatpush1.msra.mxu0 %v540
  %552 = vmatprep.subr.mxu0 0.0
  %553 = vmatpush1.msra.mxu0 %v541
  %554 = vmatprep.subr.mxu0 0.0
  %555 = vmatpush1.msra.mxu0 %v542
  %556 = vmatprep.subr.mxu0 0.0
  %557 = vmatpush1.msra.mxu0 %v543
  %558 = vmatprep.subr.mxu0 0.0
  %559 = vmatpush1.msra.mxu0 0.0
  %560 = vmatprep.subr.mxu0 0.0
  %561 = vmatpush1.msra.mxu0 0.0
  %562 = vmatprep.subr.mxu0 0.0
  %563 = vmatpush1.msra.mxu0 0.0
  %564 = vmatprep.subr.mxu0 0.0
  %565 = vmatpush1.msra.mxu0 0.0
  %566 = vmatprep.subr.mxu0 0.0
  %567 = vmatpush1.msra.mxu0 0.0
  %568 = vmatprep.subr.mxu0 0.0
  %569 = vmatpush1.msra.mxu0 0.0
  %570 = vmatprep.subr.mxu0 0.0
  %571 = vmatpush1.msra.mxu0 0.0
  %572 = vmatprep.subr.mxu0 0.0
  %573 = vmatpush1.msra.mxu0 0.0
  %574 = vmatprep.subr.mxu0 0.0
  %575 = vmatpush1.msra.mxu0 0.0
  %576 = vmatprep.subr.mxu0 0.0
  %577 = vmatpush1.msra.mxu0 0.0
  %578 = vmatprep.subr.mxu0 0.0
  %579 = vmatpush1.msra.mxu0 0.0
  %580 = vmatprep.subr.mxu0 0.0
  %581 = vmatpush1.msra.mxu0 0.0
  %582 = vmatprep.subr.mxu0 0.0
  %583 = vmatpush1.msra.mxu0 0.0
  %584 = vmatprep.subr.mxu0 0.0
  %585 = vmatpush1.msra.mxu0 0.0
  %586 = vmatprep.subr.mxu0 0.0
  %587 = vmatpush1.msra.mxu0 0.0
  %588 = vmatprep.subr.mxu0 0.0
  %589 = vmatpush1.msra.mxu0 0.0
  %590 = vmatprep.subr.mxu0 0.0
  %591 = vmatpush1.msra.mxu0 0.0
  %592 = vmatprep.subr.mxu0 0.0
  %593 = vmatpush1.msra.mxu0 0.0
  %594 = vmatprep.subr.mxu0 0.0
  %595 = vmatpush1.msra.mxu0 0.0
  %596 = vmatprep.subr.mxu0 0.0
  %597 = vmatpush1.msra.mxu0 0.0
  %598 = vmatprep.subr.mxu0 0.0
  %599 = vmatpush1.msra.mxu0 0.0
  %600 = vmatprep.subr.mxu0 0.0
  %601 = vmatpush1.msra.mxu0 0.0
  %602 = vmatprep.subr.mxu0 0.0
  %603 = vmatpush1.msra.mxu0 0.0
  %604 = vmatprep.subr.mxu0 0.0
  %605 = vmatpush1.msra.mxu0 0.0
  %606 = vmatprep.subr.mxu0 0.0
  %607 = vmatpush1.msra.mxu0 0.0
  %608 = vmatprep.subr.mxu0 0.0
  %609 = vmatpush1.msra.mxu0 0.0
  %610 = vmatprep.subr.mxu0 0.0
  %611 = vmatpush1.msra.mxu0 0.0
  %612 = vmatprep.subr.mxu0 0.0
  %613 = vmatpush1.msra.mxu0 0.0
  %614 = vmatprep.mubr.f32.mxu0 0.0
  %615 = vmatmul.mubr.f32.gmra.mrb[0].mxu0 %v545
  %v616 = vpop.f32.mrb[0].mxu0
  %v617 = vadd.f32 0.0, %v616
  %v618 = vpop.f32.mrb[0].mxu0
  %619 = vmatprep.mubr.f32.mxu0 0.0
  %620 = vmatmul.mubr.f32.gmra.mrb[0].mxu0 %v548
  %v621 = vpop.f32.mrb[0].mxu0
  %v622 = vadd.f32 0.0, %v621
  %v623 = vpop.f32.mrb[0].mxu0
  %624 = vdwg.mxu0
  %v626 = vsel %vm27, %v447, 0
  %v629 = vsel %vm27, %v452, 0
  %631 = vmatprep.subr.mxu0 0.0
  %632 = vmatpush1.msra.mxu0 %v535
  %633 = vmatprep.subr.mxu0 0.0
  %634 = vmatpush1.msra.mxu0 %v536
  %635 = vmatprep.subr.mxu0 0.0
  %636 = vmatpush1.msra.mxu0 %v537
  %637 = vmatprep.subr.mxu0 0.0
  %638 = vmatpush1.msra.mxu0 %v538
  %639 = vmatprep.subr.mxu0 0.0
  %640 = vmatpush1.msra.mxu0 0.0
  %641 = vmatprep.subr.mxu0 0.0
  %642 = vmatpush1.msra.mxu0 0.0
  %643 = vmatprep.subr.mxu0 0.0
  %644 = vmatpush1.msra.mxu0 0.0
  %645 = vmatprep.subr.mxu0 0.0
  %646 = vmatpush1.msra.mxu0 0.0
  %647 = vmatprep.subr.mxu0 0.0
  %648 = vmatpush1.msra.mxu0 0.0
  %649 = vmatprep.subr.mxu0 0.0
  %650 = vmatpush1.msra.mxu0 0.0
  %651 = vmatprep.subr.mxu0 0.0
  %652 = vmatpush1.msra.mxu0 0.0
  %653 = vmatprep.subr.mxu0 0.0
  %654 = vmatpush1.msra.mxu0 0.0
  %655 = vmatprep.subr.mxu0 0.0
  %656 = vmatpush1.msra.mxu0 0.0
  %657 = vmatprep.subr.mxu0 0.0
  %658 = vmatpush1.msra.mxu0 0.0
  %659 = vmatprep.subr.mxu0 0.0
  %660 = vmatpush1.msra.mxu0 0.0
  %661 = vmatprep.subr.mxu0 0.0
  %662 = vmatpush1.msra.mxu0 0.0
  %663 = vmatprep.subr.mxu0 0.0
  %664 = vmatpush1.msra.mxu0 0.0
  %665 = vmatprep.subr.mxu0 0.0
  %666 = vmatpush1.msra.mxu0 0.0
  %667 = vmatprep.subr.mxu0 0.0
  %668 = vmatpush1.msra.mxu0 0.0
  %669 = vmatprep.subr.mxu0 0.0
  %670 = vmatpush1.msra.mxu0 0.0
  %671 = vmatprep.subr.mxu0 0.0
  %672 = vmatpush1.msra.mxu0 0.0
  %673 = vmatprep.subr.mxu0 0.0
  %674 = vmatpush1.msra.mxu0 0.0
  %675 = vmatprep.subr.mxu0 0.0
  %676 = vmatpush1.msra.mxu0 0.0
  %677 = vmatprep.subr.mxu0 0.0
  %678 = vmatpush1.msra.mxu0 0.0
  %679 = vmatprep.subr.mxu0 0.0
  %680 = vmatpush1.msra.mxu0 0.0
  %681 = vmatprep.subr.mxu0 0.0
  %682 = vmatpush1.msra.mxu0 0.0
  %683 = vmatprep.subr.mxu0 0.0
  %684 = vmatpush1.msra.mxu0 0.0
  %685 = vmatprep.subr.mxu0 0.0
  %686 = vmatpush1.msra.mxu0 0.0
  %687 = vmatprep.subr.mxu0 0.0
  %688 = vmatpush1.msra.mxu0 0.0
  %689 = vmatprep.subr.mxu0 0.0
  %690 = vmatpush1.msra.mxu0 0.0
  %691 = vmatprep.subr.mxu0 0.0
  %692 = vmatpush1.msra.mxu0 0.0
  %693 = vmatprep.subr.mxu0 0.0
  %694 = vmatpush1.msra.mxu0 0.0
  %695 = vmatprep.mubr.f32.mxu0 0.0
  %696 = vmatmul.mubr.f32.gmra.mrb[0].mxu0 %v626
  %v697 = vpop.f32.mrb[0].mxu0
  %v698 = vadd.f32 %v617, %v697
  %v699 = vpop.f32.mrb[0].mxu0
  %700 = vmatprep.mubr.f32.mxu0 0.0
  %701 = vmatmul.mubr.f32.gmra.mrb[0].mxu0 %v629
  %v702 = vpop.f32.mrb[0].mxu0
  %v703 = vadd.f32 %v622, %v702
  %v704 = vpop.f32.mrb[0].mxu0
  %705 = vdwg.mxu0
  %s706 = scalar_lea.vmem %s5, 64
  %v707 = vld [vmem:[%s706] sm:$0xff]
  %v708 = vld [vmem:[%s706 + $0x8] sm:$0xff]
  %v709 = vld [vmem:[%s706 + $0x10] sm:$0xff]
  %v710 = vld [vmem:[%s706 + $0x18] sm:$0xff]
  %v712 = vsel %vm27, %v467, 0
  %v715 = vsel %vm27, %v472, 0
  %717 = vmatprep.subr.mxu0 0.0
  %718 = vmatpush1.msra.mxu0 %v707
  %719 = vmatprep.subr.mxu0 0.0
  %720 = vmatpush1.msra.mxu0 %v708
  %721 = vmatprep.subr.mxu0 0.0
  %722 = vmatpush1.msra.mxu0 %v709
  %723 = vmatprep.subr.mxu0 0.0
  %724 = vmatpush1.msra.mxu0 %v710
  %725 = vmatprep.subr.mxu0 0.0
  %726 = vmatpush1.msra.mxu0 0.0
  %727 = vmatprep.subr.mxu0 0.0
  %728 = vmatpush1.msra.mxu0 0.0
  %729 = vmatprep.subr.mxu0 0.0
  %730 = vmatpush1.msra.mxu0 0.0
  %731 = vmatprep.subr.mxu0 0.0
  %732 = vmatpush1.msra.mxu0 0.0
  %733 = vmatprep.subr.mxu0 0.0
  %734 = vmatpush1.msra.mxu0 0.0
  %735 = vmatprep.subr.mxu0 0.0
  %736 = vmatpush1.msra.mxu0 0.0
  %737 = vmatprep.subr.mxu0 0.0
  %738 = vmatpush1.msra.mxu0 0.0
  %739 = vmatprep.subr.mxu0 0.0
  %740 = vmatpush1.msra.mxu0 0.0
  %741 = vmatprep.subr.mxu0 0.0
  %742 = vmatpush1.msra.mxu0 0.0
  %743 = vmatprep.subr.mxu0 0.0
  %744 = vmatpush1.msra.mxu0 0.0
  %745 = vmatprep.subr.mxu0 0.0
  %746 = vmatpush1.msra.mxu0 0.0
  %747 = vmatprep.subr.mxu0 0.0
  %748 = vmatpush1.msra.mxu0 0.0
  %749 = vmatprep.subr.mxu0 0.0
  %750 = vmatpush1.msra.mxu0 0.0
  %751 = vmatprep.subr.mxu0 0.0
  %752 = vmatpush1.msra.mxu0 0.0
  %753 = vmatprep.subr.mxu0 0.0
  %754 = vmatpush1.msra.mxu0 0.0
  %755 = vmatprep.subr.mxu0 0.0
  %756 = vmatpush1.msra.mxu0 0.0
  %757 = vmatprep.subr.mxu0 0.0
  %758 = vmatpush1.msra.mxu0 0.0
  %759 = vmatprep.subr.mxu0 0.0
  %760 = vmatpush1.msra.mxu0 0.0
  %761 = vmatprep.subr.mxu0 0.0
  %762 = vmatpush1.msra.mxu0 0.0
  %763 = vmatprep.subr.mxu0 0.0
  %764 = vmatpush1.msra.mxu0 0.0
  %765 = vmatprep.subr.mxu0 0.0
  %766 = vmatpush1.msra.mxu0 0.0
  %767 = vmatprep.subr.mxu0 0.0
  %768 = vmatpush1.msra.mxu0 0.0
  %769 = vmatprep.subr.mxu0 0.0
  %770 = vmatpush1.msra.mxu0 0.0
  %771 = vmatprep.subr.mxu0 0.0
  %772 = vmatpush1.msra.mxu0 0.0
  %773 = vmatprep.subr.mxu0 0.0
  %774 = vmatpush1.msra.mxu0 0.0
  %775 = vmatprep.subr.mxu0 0.0
  %776 = vmatpush1.msra.mxu0 0.0
  %777 = vmatprep.subr.mxu0 0.0
  %778 = vmatpush1.msra.mxu0 0.0
  %779 = vmatprep.subr.mxu0 0.0
  %780 = vmatpush1.msra.mxu0 0.0
  %781 = vmatprep.mubr.f32.mxu0 0.0
  %782 = vmatmul.mubr.f32.gmra.mrb[0].mxu0 %v712
  %v783 = vpop.f32.mrb[0].mxu0
  %v784 = vadd.f32 0.0, %v783
  %v785 = vpop.f32.mrb[0].mxu0
  %786 = vmatprep.mubr.f32.mxu0 0.0
  %787 = vmatmul.mubr.f32.gmra.mrb[0].mxu0 %v715
  %v788 = vpop.f32.mrb[0].mxu0
  %v789 = vadd.f32 0.0, %v788
  %v790 = vpop.f32.mrb[0].mxu0
  %791 = vdwg.mxu0
  %v792 = vadd.f32 %v698, %v784
  %v793 = vadd.f32 %v703, %v789
  %s794 = scalar_lea.vmem %s5, 96
  %v795 = vld [vmem:[%s794] sm:$0xff]
  %v796 = vld [vmem:[%s794 + $0x8] sm:$0xff]
  %v797 = vld [vmem:[%s794 + $0x10] sm:$0xff]
  %v798 = vld [vmem:[%s794 + $0x18] sm:$0xff]
  %v800 = vsel %vm27, %v477, 0
  %v803 = vsel %vm27, %v482, 0
  %805 = vmatprep.subr.mxu0 0.0
  %806 = vmatpush1.msra.mxu0 %v795
  %807 = vmatprep.subr.mxu0 0.0
  %808 = vmatpush1.msra.mxu0 %v796
  %809 = vmatprep.subr.mxu0 0.0
  %810 = vmatpush1.msra.mxu0 %v797
  %811 = vmatprep.subr.mxu0 0.0
  %812 = vmatpush1.msra.mxu0 %v798
  %813 = vmatprep.subr.mxu0 0.0
  %814 = vmatpush1.msra.mxu0 0.0
  %815 = vmatprep.subr.mxu0 0.0
  %816 = vmatpush1.msra.mxu0 0.0
  %817 = vmatprep.subr.mxu0 0.0
  %818 = vmatpush1.msra.mxu0 0.0
  %819 = vmatprep.subr.mxu0 0.0
  %820 = vmatpush1.msra.mxu0 0.0
  %821 = vmatprep.subr.mxu0 0.0
  %822 = vmatpush1.msra.mxu0 0.0
  %823 = vmatprep.subr.mxu0 0.0
  %824 = vmatpush1.msra.mxu0 0.0
  %825 = vmatprep.subr.mxu0 0.0
  %826 = vmatpush1.msra.mxu0 0.0
  %827 = vmatprep.subr.mxu0 0.0
  %828 = vmatpush1.msra.mxu0 0.0
  %829 = vmatprep.subr.mxu0 0.0
  %830 = vmatpush1.msra.mxu0 0.0
  %831 = vmatprep.subr.mxu0 0.0
  %832 = vmatpush1.msra.mxu0 0.0
  %833 = vmatprep.subr.mxu0 0.0
  %834 = vmatpush1.msra.mxu0 0.0
  %835 = vmatprep.subr.mxu0 0.0
  %836 = vmatpush1.msra.mxu0 0.0
  %837 = vmatprep.subr.mxu0 0.0
  %838 = vmatpush1.msra.mxu0 0.0
  %839 = vmatprep.subr.mxu0 0.0
  %840 = vmatpush1.msra.mxu0 0.0
  %841 = vmatprep.subr.mxu0 0.0
  %842 = vmatpush1.msra.mxu0 0.0
  %843 = vmatprep.subr.mxu0 0.0
  %844 = vmatpush1.msra.mxu0 0.0
  %845 = vmatprep.subr.mxu0 0.0
  %846 = vmatpush1.msra.mxu0 0.0
  %847 = vmatprep.subr.mxu0 0.0
  %848 = vmatpush1.msra.mxu0 0.0
  %849 = vmatprep.subr.mxu0 0.0
  %850 = vmatpush1.msra.mxu0 0.0
  %851 = vmatprep.subr.mxu0 0.0
  %852 = vmatpush1.msra.mxu0 0.0
  %853 = vmatprep.subr.mxu0 0.0
  %854 = vmatpush1.msra.mxu0 0.0
  %855 = vmatprep.subr.mxu0 0.0
  %856 = vmatpush1.msra.mxu0 0.0
  %857 = vmatprep.subr.mxu0 0.0
  %858 = vmatpush1.msra.mxu0 0.0
  %859 = vmatprep.subr.mxu0 0.0
  %860 = vmatpush1.msra.mxu0 0.0
  %861 = vmatprep.subr.mxu0 0.0
  %862 = vmatpush1.msra.mxu0 0.0
  %863 = vmatprep.subr.mxu0 0.0
  %864 = vmatpush1.msra.mxu0 0.0
  %865 = vmatprep.subr.mxu0 0.0
  %866 = vmatpush1.msra.mxu0 0.0
  %867 = vmatprep.subr.mxu0 0.0
  %868 = vmatpush1.msra.mxu0 0.0
  %869 = vmatprep.mubr.f32.mxu0 0.0
  %870 = vmatmul.mubr.f32.gmra.mrb[0].mxu0 %v800
  %v871 = vpop.f32.mrb[0].mxu0
  %v872 = vadd.f32 0.0, %v871
  %v873 = vpop.f32.mrb[0].mxu0
  %874 = vmatprep.mubr.f32.mxu0 0.0
  %875 = vmatmul.mubr.f32.gmra.mrb[0].mxu0 %v803
  %v876 = vpop.f32.mrb[0].mxu0
  %v877 = vadd.f32 0.0, %v876
  %v878 = vpop.f32.mrb[0].mxu0
  %879 = vdwg.mxu0
  %v880 = vadd.f32 %v792, %v872
  %v881 = vadd.f32 %v793, %v877
  %s882 = scalar_lea.vmem %s5, 128
  %v883 = vld [vmem:[%s882] sm:$0xff]
  %v884 = vld [vmem:[%s882 + $0x8] sm:$0xff]
  %v885 = vld [vmem:[%s882 + $0x10] sm:$0xff]
  %v886 = vld [vmem:[%s882 + $0x18] sm:$0xff]
  %v888 = vsel %vm27, %v487, 0
  %v891 = vsel %vm27, %v492, 0
  %893 = vmatprep.subr.mxu0 0.0
  %894 = vmatpush1.msra.mxu0 %v883
  %895 = vmatprep.subr.mxu0 0.0
  %896 = vmatpush1.msra.mxu0 %v884
  %897 = vmatprep.subr.mxu0 0.0
  %898 = vmatpush1.msra.mxu0 %v885
  %899 = vmatprep.subr.mxu0 0.0
  %900 = vmatpush1.msra.mxu0 %v886
  %901 = vmatprep.subr.mxu0 0.0
  %902 = vmatpush1.msra.mxu0 0.0
  %903 = vmatprep.subr.mxu0 0.0
  %904 = vmatpush1.msra.mxu0 0.0
  %905 = vmatprep.subr.mxu0 0.0
  %906 = vmatpush1.msra.mxu0 0.0
  %907 = vmatprep.subr.mxu0 0.0
  %908 = vmatpush1.msra.mxu0 0.0
  %909 = vmatprep.subr.mxu0 0.0
  %910 = vmatpush1.msra.mxu0 0.0
  %911 = vmatprep.subr.mxu0 0.0
  %912 = vmatpush1.msra.mxu0 0.0
  %913 = vmatprep.subr.mxu0 0.0
  %914 = vmatpush1.msra.mxu0 0.0
  %915 = vmatprep.subr.mxu0 0.0
  %916 = vmatpush1.msra.mxu0 0.0
  %917 = vmatprep.subr.mxu0 0.0
  %918 = vmatpush1.msra.mxu0 0.0
  %919 = vmatprep.subr.mxu0 0.0
  %920 = vmatpush1.msra.mxu0 0.0
  %921 = vmatprep.subr.mxu0 0.0
  %922 = vmatpush1.msra.mxu0 0.0
  %923 = vmatprep.subr.mxu0 0.0
  %924 = vmatpush1.msra.mxu0 0.0
  %925 = vmatprep.subr.mxu0 0.0
  %926 = vmatpush1.msra.mxu0 0.0
  %927 = vmatprep.subr.mxu0 0.0
  %928 = vmatpush1.msra.mxu0 0.0
  %929 = vmatprep.subr.mxu0 0.0
  %930 = vmatpush1.msra.mxu0 0.0
  %931 = vmatprep.subr.mxu0 0.0
  %932 = vmatpush1.msra.mxu0 0.0
  %933 = vmatprep.subr.mxu0 0.0
  %934 = vmatpush1.msra.mxu0 0.0
  %935 = vmatprep.subr.mxu0 0.0
  %936 = vmatpush1.msra.mxu0 0.0
  %937 = vmatprep.subr.mxu0 0.0
  %938 = vmatpush1.msra.mxu0 0.0
  %939 = vmatprep.subr.mxu0 0.0
  %940 = vmatpush1.msra.mxu0 0.0
  %941 = vmatprep.subr.mxu0 0.0
  %942 = vmatpush1.msra.mxu0 0.0
  %943 = vmatprep.subr.mxu0 0.0
  %944 = vmatpush1.msra.mxu0 0.0
  %945 = vmatprep.subr.mxu0 0.0
  %946 = vmatpush1.msra.mxu0 0.0
  %947 = vmatprep.subr.mxu0 0.0
  %948 = vmatpush1.msra.mxu0 0.0
  %949 = vmatprep.subr.mxu0 0.0
  %950 = vmatpush1.msra.mxu0 0.0
  %951 = vmatprep.subr.mxu0 0.0
  %952 = vmatpush1.msra.mxu0 0.0
  %953 = vmatprep.subr.mxu0 0.0
  %954 = vmatpush1.msra.mxu0 0.0
  %955 = vmatprep.subr.mxu0 0.0
  %956 = vmatpush1.msra.mxu0 0.0
  %957 = vmatprep.mubr.f32.mxu0 0.0
  %958 = vmatmul.mubr.f32.gmra.mrb[0].mxu0 %v888
  %v959 = vpop.f32.mrb[0].mxu0
  %v960 = vadd.f32 0.0, %v959
  %v961 = vpop.f32.mrb[0].mxu0
  %962 = vmatprep.mubr.f32.mxu0 0.0
  %963 = vmatmul.mubr.f32.gmra.mrb[0].mxu0 %v891
  %v964 = vpop.f32.mrb[0].mxu0
  %v965 = vadd.f32 0.0, %v964
  %v966 = vpop.f32.mrb[0].mxu0
  %967 = vdwg.mxu0
  %v968 = vadd.f32 %v880, %v960
  %v969 = vadd.f32 %v881, %v965
  %s970 = scalar_lea.vmem %s5, 160
  %v971 = vld [vmem:[%s970] sm:$0xff]
  %v972 = vld [vmem:[%s970 + $0x8] sm:$0xff]
  %v973 = vld [vmem:[%s970 + $0x10] sm:$0xff]
  %v974 = vld [vmem:[%s970 + $0x18] sm:$0xff]
  %v976 = vsel %vm27, %v497, 0
  %v979 = vsel %vm27, %v502, 0
  %981 = vmatprep.subr.mxu0 0.0
  %982 = vmatpush1.msra.mxu0 %v971
  %983 = vmatprep.subr.mxu0 0.0
  %984 = vmatpush1.msra.mxu0 %v972
  %985 = vmatprep.subr.mxu0 0.0
  %986 = vmatpush1.msra.mxu0 %v973
  %987 = vmatprep.subr.mxu0 0.0
  %988 = vmatpush1.msra.mxu0 %v974
  %989 = vmatprep.subr.mxu0 0.0
  %990 = vmatpush1.msra.mxu0 0.0
  %991 = vmatprep.subr.mxu0 0.0
  %992 = vmatpush1.msra.mxu0 0.0
  %993 = vmatprep.subr.mxu0 0.0
  %994 = vmatpush1.msra.mxu0 0.0
  %995 = vmatprep.subr.mxu0 0.0
  %996 = vmatpush1.msra.mxu0 0.0
  %997 = vmatprep.subr.mxu0 0.0
  %998 = vmatpush1.msra.mxu0 0.0
  %999 = vmatprep.subr.mxu0 0.0
  %1000 = vmatpush1.msra.mxu0 0.0
  %1001 = vmatprep.subr.mxu0 0.0
  %1002 = vmatpush1.msra.mxu0 0.0
  %1003 = vmatprep.subr.mxu0 0.0
  %1004 = vmatpush1.msra.mxu0 0.0
  %1005 = vmatprep.subr.mxu0 0.0
  %1006 = vmatpush1.msra.mxu0 0.0
  %1007 = vmatprep.subr.mxu0 0.0
  %1008 = vmatpush1.msra.mxu0 0.0
  %1009 = vmatprep.subr.mxu0 0.0
  %1010 = vmatpush1.msra.mxu0 0.0
  %1011 = vmatprep.subr.mxu0 0.0
  %1012 = vmatpush1.msra.mxu0 0.0
  %1013 = vmatprep.subr.mxu0 0.0
  %1014 = vmatpush1.msra.mxu0 0.0
  %1015 = vmatprep.subr.mxu0 0.0
  %1016 = vmatpush1.msra.mxu0 0.0
  %1017 = vmatprep.subr.mxu0 0.0
  %1018 = vmatpush1.msra.mxu0 0.0
  %1019 = vmatprep.subr.mxu0 0.0
  %1020 = vmatpush1.msra.mxu0 0.0
  %1021 = vmatprep.subr.mxu0 0.0
  %1022 = vmatpush1.msra.mxu0 0.0
  %1023 = vmatprep.subr.mxu0 0.0
  %1024 = vmatpush1.msra.mxu0 0.0
  %1025 = vmatprep.subr.mxu0 0.0
  %1026 = vmatpush1.msra.mxu0 0.0
  %1027 = vmatprep.subr.mxu0 0.0
  %1028 = vmatpush1.msra.mxu0 0.0
  %1029 = vmatprep.subr.mxu0 0.0
  %1030 = vmatpush1.msra.mxu0 0.0
  %1031 = vmatprep.subr.mxu0 0.0
  %1032 = vmatpush1.msra.mxu0 0.0
  %1033 = vmatprep.subr.mxu0 0.0
  %1034 = vmatpush1.msra.mxu0 0.0
  %1035 = vmatprep.subr.mxu0 0.0
  %1036 = vmatpush1.msra.mxu0 0.0
  %1037 = vmatprep.subr.mxu0 0.0
  %1038 = vmatpush1.msra.mxu0 0.0
  %1039 = vmatprep.subr.mxu0 0.0
  %1040 = vmatpush1.msra.mxu0 0.0
  %1041 = vmatprep.subr.mxu0 0.0
  %1042 = vmatpush1.msra.mxu0 0.0
  %1043 = vmatprep.subr.mxu0 0.0
  %1044 = vmatpush1.msra.mxu0 0.0
  %1045 = vmatprep.mubr.f32.mxu0 0.0
  %1046 = vmatmul.mubr.f32.gmra.mrb[0].mxu0 %v976
  %v1047 = vpop.f32.mrb[0].mxu0
  %v1048 = vadd.f32 0.0, %v1047
  %v1049 = vpop.f32.mrb[0].mxu0
  %1050 = vmatprep.mubr.f32.mxu0 0.0
  %1051 = vmatmul.mubr.f32.gmra.mrb[0].mxu0 %v979
  %v1052 = vpop.f32.mrb[0].mxu0
  %v1053 = vadd.f32 0.0, %v1052
  %v1054 = vpop.f32.mrb[0].mxu0
  %1055 = vdwg.mxu0
  %v1056 = vadd.f32 %v968, %v1048
  %v1057 = vadd.f32 %v969, %v1053
  %s1058 = scalar_lea.vmem %s5, 192
  %v1059 = vld [vmem:[%s1058] sm:$0xff]
  %v1060 = vld [vmem:[%s1058 + $0x8] sm:$0xff]
  %v1061 = vld [vmem:[%s1058 + $0x10] sm:$0xff]
  %v1062 = vld [vmem:[%s1058 + $0x18] sm:$0xff]
  %v1064 = vsel %vm27, %v507, 0
  %v1067 = vsel %vm27, %v512, 0
  %1069 = vmatprep.subr.mxu0 0.0
  %1070 = vmatpush1.msra.mxu0 %v1059
  %1071 = vmatprep.subr.mxu0 0.0
  %1072 = vmatpush1.msra.mxu0 %v1060
  %1073 = vmatprep.subr.mxu0 0.0
  %1074 = vmatpush1.msra.mxu0 %v1061
  %1075 = vmatprep.subr.mxu0 0.0
  %1076 = vmatpush1.msra.mxu0 %v1062
  %1077 = vmatprep.subr.mxu0 0.0
  %1078 = vmatpush1.msra.mxu0 0.0
  %1079 = vmatprep.subr.mxu0 0.0
  %1080 = vmatpush1.msra.mxu0 0.0
  %1081 = vmatprep.subr.mxu0 0.0
  %1082 = vmatpush1.msra.mxu0 0.0
  %1083 = vmatprep.subr.mxu0 0.0
  %1084 = vmatpush1.msra.mxu0 0.0
  %1085 = vmatprep.subr.mxu0 0.0
  %1086 = vmatpush1.msra.mxu0 0.0
  %1087 = vmatprep.subr.mxu0 0.0
  %1088 = vmatpush1.msra.mxu0 0.0
  %1089 = vmatprep.subr.mxu0 0.0
  %1090 = vmatpush1.msra.mxu0 0.0
  %1091 = vmatprep.subr.mxu0 0.0
  %1092 = vmatpush1.msra.mxu0 0.0
  %1093 = vmatprep.subr.mxu0 0.0
  %1094 = vmatpush1.msra.mxu0 0.0
  %1095 = vmatprep.subr.mxu0 0.0
  %1096 = vmatpush1.msra.mxu0 0.0
  %1097 = vmatprep.subr.mxu0 0.0
  %1098 = vmatpush1.msra.mxu0 0.0
  %1099 = vmatprep.subr.mxu0 0.0
  %1100 = vmatpush1.msra.mxu0 0.0
  %1101 = vmatprep.subr.mxu0 0.0
  %1102 = vmatpush1.msra.mxu0 0.0
  %1103 = vmatprep.subr.mxu0 0.0
  %1104 = vmatpush1.msra.mxu0 0.0
  %1105 = vmatprep.subr.mxu0 0.0
  %1106 = vmatpush1.msra.mxu0 0.0
  %1107 = vmatprep.subr.mxu0 0.0
  %1108 = vmatpush1.msra.mxu0 0.0
  %1109 = vmatprep.subr.mxu0 0.0
  %1110 = vmatpush1.msra.mxu0 0.0
  %1111 = vmatprep.subr.mxu0 0.0
  %1112 = vmatpush1.msra.mxu0 0.0
  %1113 = vmatprep.subr.mxu0 0.0
  %1114 = vmatpush1.msra.mxu0 0.0
  %1115 = vmatprep.subr.mxu0 0.0
  %1116 = vmatpush1.msra.mxu0 0.0
  %1117 = vmatprep.subr.mxu0 0.0
  %1118 = vmatpush1.msra.mxu0 0.0
  %1119 = vmatprep.subr.mxu0 0.0
  %1120 = vmatpush1.msra.mxu0 0.0
  %1121 = vmatprep.subr.mxu0 0.0
  %1122 = vmatpush1.msra.mxu0 0.0
  %1123 = vmatprep.subr.mxu0 0.0
  %1124 = vmatpush1.msra.mxu0 0.0
  %1125 = vmatprep.subr.mxu0 0.0
  %1126 = vmatpush1.msra.mxu0 0.0
  %1127 = vmatprep.subr.mxu0 0.0
  %1128 = vmatpush1.msra.mxu0 0.0
  %1129 = vmatprep.subr.mxu0 0.0
  %1130 = vmatpush1.msra.mxu0 0.0
  %1131 = vmatprep.subr.mxu0 0.0
  %1132 = vmatpush1.msra.mxu0 0.0
  %1133 = vmatprep.mubr.f32.mxu0 0.0
  %1134 = vmatmul.mubr.f32.gmra.mrb[0].mxu0 %v1064
  %v1135 = vpop.f32.mrb[0].mxu0
  %v1136 = vadd.f32 0.0, %v1135
  %v1137 = vpop.f32.mrb[0].mxu0
  %1138 = vmatprep.mubr.f32.mxu0 0.0
  %1139 = vmatmul.mubr.f32.gmra.mrb[0].mxu0 %v1067
  %v1140 = vpop.f32.mrb[0].mxu0
  %v1141 = vadd.f32 0.0, %v1140
  %v1142 = vpop.f32.mrb[0].mxu0
  %1143 = vdwg.mxu0
  %v1144 = vadd.f32 %v1056, %v1136
  %v1145 = vadd.f32 %v1057, %v1141
  %s1146 = scalar_lea.vmem %s5, 224
  %v1147 = vld [vmem:[%s1146] sm:$0xff]
  %v1148 = vld [vmem:[%s1146 + $0x8] sm:$0xff]
  %v1149 = vld [vmem:[%s1146 + $0x10] sm:$0xff]
  %v1150 = vld [vmem:[%s1146 + $0x18] sm:$0xff]
  %v1152 = vsel %vm27, %v517, 0
  %v1155 = vsel %vm27, %v522, 0
  %1157 = vmatprep.subr.mxu0 0.0
  %1158 = vmatpush1.msra.mxu0 %v1147
  %1159 = vmatprep.subr.mxu0 0.0
  %1160 = vmatpush1.msra.mxu0 %v1148
  %1161 = vmatprep.subr.mxu0 0.0
  %1162 = vmatpush1.msra.mxu0 %v1149
  %1163 = vmatprep.subr.mxu0 0.0
  %1164 = vmatpush1.msra.mxu0 %v1150
  %1165 = vmatprep.subr.mxu0 0.0
  %1166 = vmatpush1.msra.mxu0 0.0
  %1167 = vmatprep.subr.mxu0 0.0
  %1168 = vmatpush1.msra.mxu0 0.0
  %1169 = vmatprep.subr.mxu0 0.0
  %1170 = vmatpush1.msra.mxu0 0.0
  %1171 = vmatprep.subr.mxu0 0.0
  %1172 = vmatpush1.msra.mxu0 0.0
  %1173 = vmatprep.subr.mxu0 0.0
  %1174 = vmatpush1.msra.mxu0 0.0
  %1175 = vmatprep.subr.mxu0 0.0
  %1176 = vmatpush1.msra.mxu0 0.0
  %1177 = vmatprep.subr.mxu0 0.0
  %1178 = vmatpush1.msra.mxu0 0.0
  %1179 = vmatprep.subr.mxu0 0.0
  %1180 = vmatpush1.msra.mxu0 0.0
  %1181 = vmatprep.subr.mxu0 0.0
  %1182 = vmatpush1.msra.mxu0 0.0
  %1183 = vmatprep.subr.mxu0 0.0
  %1184 = vmatpush1.msra.mxu0 0.0
  %1185 = vmatprep.subr.mxu0 0.0
  %1186 = vmatpush1.msra.mxu0 0.0
  %1187 = vmatprep.subr.mxu0 0.0
  %1188 = vmatpush1.msra.mxu0 0.0
  %1189 = vmatprep.subr.mxu0 0.0
  %1190 = vmatpush1.msra.mxu0 0.0
  %1191 = vmatprep.subr.mxu0 0.0
  %1192 = vmatpush1.msra.mxu0 0.0
  %1193 = vmatprep.subr.mxu0 0.0
  %1194 = vmatpush1.msra.mxu0 0.0
  %1195 = vmatprep.subr.mxu0 0.0
  %1196 = vmatpush1.msra.mxu0 0.0
  %1197 = vmatprep.subr.mxu0 0.0
  %1198 = vmatpush1.msra.mxu0 0.0
  %1199 = vmatprep.subr.mxu0 0.0
  %1200 = vmatpush1.msra.mxu0 0.0
  %1201 = vmatprep.subr.mxu0 0.0
  %1202 = vmatpush1.msra.mxu0 0.0
  %1203 = vmatprep.subr.mxu0 0.0
  %1204 = vmatpush1.msra.mxu0 0.0
  %1205 = vmatprep.subr.mxu0 0.0
  %1206 = vmatpush1.msra.mxu0 0.0
  %1207 = vmatprep.subr.mxu0 0.0
  %1208 = vmatpush1.msra.mxu0 0.0
  %1209 = vmatprep.subr.mxu0 0.0
  %1210 = vmatpush1.msra.mxu0 0.0
  %1211 = vmatprep.subr.mxu0 0.0
  %1212 = vmatpush1.msra.mxu0 0.0
  %1213 = vmatprep.subr.mxu0 0.0
  %1214 = vmatpush1.msra.mxu0 0.0
  %1215 = vmatprep.subr.mxu0 0.0
  %1216 = vmatpush1.msra.mxu0 0.0
  %1217 = vmatprep.subr.mxu0 0.0
  %1218 = vmatpush1.msra.mxu0 0.0
  %1219 = vmatprep.subr.mxu0 0.0
  %1220 = vmatpush1.msra.mxu0 0.0
  %1221 = vmatprep.mubr.f32.mxu0 0.0
  %1222 = vmatmul.mubr.f32.gmra.mrb[0].mxu0 %v1152
  %v1223 = vpop.f32.mrb[0].mxu0
  %v1224 = vadd.f32 0.0, %v1223
  %v1225 = vpop.f32.mrb[0].mxu0
  %1226 = vmatprep.mubr.f32.mxu0 0.0
  %1227 = vmatmul.mubr.f32.gmra.mrb[0].mxu0 %v1155
  %v1228 = vpop.f32.mrb[0].mxu0
  %v1229 = vadd.f32 0.0, %v1228
  %v1230 = vpop.f32.mrb[0].mxu0
  %1231 = vdwg.mxu0
  %v1232 = vadd.f32 %v1144, %v1224
  %v1233 = vadd.f32 %v1145, %v1229
  %s1234 = scalar_lea.vmem %s5, 256
  %v1235 = vld [vmem:[%s1234] sm:$0xff]
  %v1236 = vld [vmem:[%s1234 + $0x8] sm:$0xff]
  %v1237 = vld [vmem:[%s1234 + $0x10] sm:$0xff]
  %v1238 = vld [vmem:[%s1234 + $0x18] sm:$0xff]
  %v1240 = vsel %vm27, %v527, 0
  %v1243 = vsel %vm27, %v532, 0
  %1245 = vmatprep.subr.mxu0 0.0
  %1246 = vmatpush1.msra.mxu0 %v1235
  %1247 = vmatprep.subr.mxu0 0.0
  %1248 = vmatpush1.msra.mxu0 %v1236
  %1249 = vmatprep.subr.mxu0 0.0
  %1250 = vmatpush1.msra.mxu0 %v1237
  %1251 = vmatprep.subr.mxu0 0.0
  %1252 = vmatpush1.msra.mxu0 %v1238
  %1253 = vmatprep.subr.mxu0 0.0
  %1254 = vmatpush1.msra.mxu0 0.0
  %1255 = vmatprep.subr.mxu0 0.0
  %1256 = vmatpush1.msra.mxu0 0.0
  %1257 = vmatprep.subr.mxu0 0.0
  %1258 = vmatpush1.msra.mxu0 0.0
  %1259 = vmatprep.subr.mxu0 0.0
  %1260 = vmatpush1.msra.mxu0 0.0
  %1261 = vmatprep.subr.mxu0 0.0
  %1262 = vmatpush1.msra.mxu0 0.0
  %1263 = vmatprep.subr.mxu0 0.0
  %1264 = vmatpush1.msra.mxu0 0.0
  %1265 = vmatprep.subr.mxu0 0.0
  %1266 = vmatpush1.msra.mxu0 0.0
  %1267 = vmatprep.subr.mxu0 0.0
  %1268 = vmatpush1.msra.mxu0 0.0
  %1269 = vmatprep.subr.mxu0 0.0
  %1270 = vmatpush1.msra.mxu0 0.0
  %1271 = vmatprep.subr.mxu0 0.0
  %1272 = vmatpush1.msra.mxu0 0.0
  %1273 = vmatprep.subr.mxu0 0.0
  %1274 = vmatpush1.msra.mxu0 0.0
  %1275 = vmatprep.subr.mxu0 0.0
  %1276 = vmatpush1.msra.mxu0 0.0
  %1277 = vmatprep.subr.mxu0 0.0
  %1278 = vmatpush1.msra.mxu0 0.0
  %1279 = vmatprep.subr.mxu0 0.0
  %1280 = vmatpush1.msra.mxu0 0.0
  %1281 = vmatprep.subr.mxu0 0.0
  %1282 = vmatpush1.msra.mxu0 0.0
  %1283 = vmatprep.subr.mxu0 0.0
  %1284 = vmatpush1.msra.mxu0 0.0
  %1285 = vmatprep.subr.mxu0 0.0
  %1286 = vmatpush1.msra.mxu0 0.0
  %1287 = vmatprep.subr.mxu0 0.0
  %1288 = vmatpush1.msra.mxu0 0.0
  %1289 = vmatprep.subr.mxu0 0.0
  %1290 = vmatpush1.msra.mxu0 0.0
  %1291 = vmatprep.subr.mxu0 0.0
  %1292 = vmatpush1.msra.mxu0 0.0
  %1293 = vmatprep.subr.mxu0 0.0
  %1294 = vmatpush1.msra.mxu0 0.0
  %1295 = vmatprep.subr.mxu0 0.0
  %1296 = vmatpush1.msra.mxu0 0.0
  %1297 = vmatprep.subr.mxu0 0.0
  %1298 = vmatpush1.msra.mxu0 0.0
  %1299 = vmatprep.subr.mxu0 0.0
  %1300 = vmatpush1.msra.mxu0 0.0
  %1301 = vmatprep.subr.mxu0 0.0
  %1302 = vmatpush1.msra.mxu0 0.0
  %1303 = vmatprep.subr.mxu0 0.0
  %1304 = vmatpush1.msra.mxu0 0.0
  %1305 = vmatprep.subr.mxu0 0.0
  %1306 = vmatpush1.msra.mxu0 0.0
  %1307 = vmatprep.subr.mxu0 0.0
  %1308 = vmatpush1.msra.mxu0 0.0
  %1309 = vmatprep.mubr.f32.mxu0 0.0
  %1310 = vmatmul.mubr.f32.gmra.mrb[0].mxu0 %v1240
  %v1311 = vpop.f32.mrb[0].mxu0
  %v1312 = vadd.f32 0.0, %v1311
  %v1313 = vpop.f32.mrb[0].mxu0
  %1314 = vmatprep.mubr.f32.mxu0 0.0
  %1315 = vmatmul.mubr.f32.gmra.mrb[0].mxu0 %v1243
  %v1316 = vpop.f32.mrb[0].mxu0
  %v1317 = vadd.f32 0.0, %v1316
  %v1318 = vpop.f32.mrb[0].mxu0
  %1319 = vdwg.mxu0
  %v1320 = vadd.f32 %v1232, %v1312
  %v1321 = vadd.f32 %v1233, %v1317
  %1322 = vst [vmem:[%s6] sm:$0xff] %v1320
  %1323 = vst [vmem:[%s6 + $0x8] sm:$0xff] %v1321
  // Predicated region
  $region26: #{decoder_forward.1} parent=0 // pred_check
    _
  $region27: #{decoder_forward.1} parent=0 // pred_check_branch
    %1325 = sbr.rel (0) target = $region29
  $region28: #{decoder_forward.1} parent=0 // pred_region
    _
  $region29: #{decoder_forward.1} parent=0 // pred_fallthru
    _
  // Predicated region
  $region30: #{decoder_forward.1} parent=0 // pred_check
    _
  $region31: #{decoder_forward.1} parent=0 // pred_check_branch
    %1327 = sbr.rel (0) target = $region33
  $region32: #{decoder_forward.1} parent=0 // pred_region
    _
  $region33: #{decoder_forward.1} parent=0 // pred_fallthru
    _

</llo_original>
